<compile_context>
chip_gen: v7x
topology: tpu7x:2x2x1
jax: 0.10.0
libtpu: 0.0.40
codegen_flags: <defaults>
</compile_context>

<pallas_src>
import jax
import jax.numpy as jnp
from jax.experimental import pallas as pl
from jax.experimental.pallas import tpu as pltpu

LANE = 128      # lane width: hidden feature dims are padded to a multiple of this
TM_MAX = 512    # max batch-tile rows (amortizes per-grid-step overhead)


def _round_up(n, m):
    return ((n + m - 1) // m) * m


def _mlp_kernel(x_ref, w0_ref, b0_ref, w1_ref, b1_ref, w2_ref, b2_ref,
                wo_ref, bo_ref, o_ref):
    # Cast the (tm, state_space) f32 input tile to bf16 in-VMEM (no extra
    # HBM pass), run bf16 x bf16 -> f32-accumulate matmuls on the MXU,
    # keep bias/ReLU in f32 on the VPU, downcast only at the final store.
    x = x_ref[...].astype(jnp.bfloat16)

    h = jnp.dot(x, w0_ref[...], preferred_element_type=jnp.float32)
    h = jnp.maximum(h + b0_ref[...], 0.0)

    h = jnp.dot(h.astype(jnp.bfloat16), w1_ref[...],
                preferred_element_type=jnp.float32)
    h = jnp.maximum(h + b1_ref[...], 0.0)

    h = jnp.dot(h.astype(jnp.bfloat16), w2_ref[...],
                preferred_element_type=jnp.float32)
    h = jnp.maximum(h + b2_ref[...], 0.0)

    out = jnp.dot(h.astype(jnp.bfloat16), wo_ref[...],
                  preferred_element_type=jnp.float32)
    o_ref[...] = (out + bo_ref[...]).astype(o_ref.dtype)


def prepare_dense_network_params(params):
    """One-time prep: pad hidden dims to 128 lanes, cast weights to bf16.

    params: list of 4 (W, b) pairs, W is (in, out) == PyTorch W^T, b is (1, out).
    Returns a list of (W_padded_bf16, b_padded_f32) pairs ready for the kernel.
    The first layer's in-dim is left at state_space (x streams in unpadded) and
    the last layer's out-dim is left at action_space (output stores unpadded).
    """
    n = len(params)
    prepared = []
    for li, (w, b) in enumerate(params):
        fan_in, fan_out = w.shape
        in_p = fan_in if li == 0 else _round_up(fan_in, LANE)
        out_p = fan_out if li == n - 1 else _round_up(fan_out, LANE)
        w_p = jnp.zeros((in_p, out_p), jnp.bfloat16)
        w_p = w_p.at[:fan_in, :fan_out].set(w.astype(jnp.bfloat16))
        b_p = jnp.zeros((1, out_p), jnp.float32)
        b_p = b_p.at[:, :fan_out].set(b.astype(jnp.float32))
        prepared.append((w_p, b_p))
    return prepared


@jax.jit
def dense_network_forward(x, prepared):
    """Forward pass of DenseNetwork (ls == 3 branch: input, l1, l2, output).

    x:        (B, state_space) f32, unpadded.
    prepared: output of prepare_dense_network_params (padded bf16 weights).
    Returns (B, action_space) f32.
    """
    B, state_space = x.shape
    action_space = prepared[-1][0].shape[1]
    flat = [a for wb in prepared for a in wb]   # [w0, b0, w1, b1, w2, b2, wo, bo]

    # Batch tiling: whole batch in one tile up to TM_MAX rows; else 512-row
    # tiles on a parallel grid axis (>= 2 tiles for B > 512, which also keeps
    # both v7x TensorCores busy for large batches).
    tm = B if B <= TM_MAX else TM_MAX
    grid = (pl.cdiv(B, tm),)

    # x: lane dim equals the full array dim -> no lane padding needed.
    in_specs = [pl.BlockSpec((tm, state_space), lambda i: (i, 0))]
    for a in flat:
        # Constant block index: tiny weights/biases stay resident in VMEM and
        # are not re-fetched across batch-grid steps.
        in_specs.append(pl.BlockSpec(a.shape, lambda i: (0, 0)))
    # Output is stored at its true (B, action_space) shape: no padded slab,
    # no post-kernel slice pass.
    out_specs = pl.BlockSpec((tm, action_space), lambda i: (i, 0))

    return pl.pallas_call(
        _mlp_kernel,
        out_shape=jax.ShapeDtypeStruct((B, action_space), jnp.float32),
        grid=grid,
        in_specs=in_specs,
        out_specs=out_specs,
        compiler_params=pltpu.CompilerParams(
            dimension_semantics=("parallel",)),   # batch tiles independent
    )(x, *flat)


def init_dense_network(key, state_space, action_space, layers):
    """Deterministic PyTorch-Linear-style init: U(-1/sqrt(fan_in), 1/sqrt(fan_in))."""
    assert len(layers) == 3, "this script instantiates the ls > 2 branch"
    dims = [state_space] + list(layers) + [action_space]
    params = []
    for i in range(len(dims) - 1):
        fan_in, fan_out = dims[i], dims[i + 1]
        key, kw, kb = jax.random.split(key, 3)
        bound = 1.0 / jnp.sqrt(jnp.float32(fan_in))
        w = jax.random.uniform(kw, (fan_in, fan_out), jnp.float32, -bound, bound)
        b = jax.random.uniform(kb, (1, fan_out), jnp.float32, -bound, bound)
        params.append((w, b))
    return params


def _reference_forward(x, params):
    h = x
    for i, (w, b) in enumerate(params):
        h = h @ w + b
        if i < len(params) - 1:
            h = jnp.maximum(h, 0.0)
    return h


# TODO(synk): the optim.Adam / F.mse_loss members of the PyTorch module are
# training-only machinery and are not part of forward(); not translated.

if __name__ == "__main__":
    key = jax.random.PRNGKey(0)
    key, kx = jax.random.split(key)

    batch = 2
    state_space = 16
    layers = [32, 32, 32]   # ls = 3 -> input, l1, l2, output all active
    action_space = 4

    x = jax.random.normal(kx, (batch, state_space), jnp.float32)
    params = init_dense_network(key, state_space, action_space, layers)
    prepared = prepare_dense_network_params(params)   # pad + cast ONCE

    out = jax.block_until_ready(dense_network_forward(x, prepared))
    ref = _reference_forward(x, params)
    assert out.shape == (batch, action_space)
    assert jnp.allclose(out, ref, atol=3e-2, rtol=3e-2), "mismatch vs reference (small batch)"

    # Larger batch exercises the multi-tile parallel batch grid (2 tiles of 512
    # rows -> both v7x TensorCores busy; amortized grid overhead on v5e/v6e).
    key, kx2 = jax.random.split(key)
    xb = jax.random.normal(kx2, (1024, state_space), jnp.float32)
    outb = jax.block_until_ready(dense_network_forward(xb, prepared))
    refb = _reference_forward(xb, params)
    assert outb.shape == (1024, action_space)
    assert jnp.allclose(outb, refb, atol=3e-2, rtol=3e-2), "mismatch vs reference (batched)"

    print("KERNEL_OK")
</pallas_src>

<mosaic_0001>
module attributes {stable_mosaic.version = 11 : i64} {
  func.func @_mlp_kernel(%arg0: i32, %arg1: memref<2x16xf32, #tpu.memory_space<vmem>>, %arg2: memref<16x128xbf16, #tpu.memory_space<vmem>>, %arg3: memref<1x128xf32, #tpu.memory_space<vmem>>, %arg4: memref<128x128xbf16, #tpu.memory_space<vmem>>, %arg5: memref<1x128xf32, #tpu.memory_space<vmem>>, %arg6: memref<128x128xbf16, #tpu.memory_space<vmem>>, %arg7: memref<1x128xf32, #tpu.memory_space<vmem>>, %arg8: memref<128x4xbf16, #tpu.memory_space<vmem>>, %arg9: memref<1x4xf32, #tpu.memory_space<vmem>>, %arg10: memref<2x4xf32, #tpu.memory_space<vmem>>) attributes {dimension_semantics = [#tpu.dimension_semantics<parallel>], iteration_bounds = array<i64: 1>, scalar_prefetch = 0 : i64, scratch_operands = 0 : i64, tpu.core_type = #tpu.core_type<tc>, window_params = [{transform_indices = @transform_0, window_bounds = array<i64: 2, 16>}, {pipeline_mode = #tpu.pipeline_mode<synchronous>, transform_indices = @transform_1, window_bounds = array<i64: 16, 128>}, {pipeline_mode = #tpu.pipeline_mode<synchronous>, transform_indices = @transform_2, window_bounds = array<i64: 1, 128>}, {pipeline_mode = #tpu.pipeline_mode<synchronous>, transform_indices = @transform_3, window_bounds = array<i64: 128, 128>}, {pipeline_mode = #tpu.pipeline_mode<synchronous>, transform_indices = @transform_4, window_bounds = array<i64: 1, 128>}, {pipeline_mode = #tpu.pipeline_mode<synchronous>, transform_indices = @transform_5, window_bounds = array<i64: 128, 128>}, {pipeline_mode = #tpu.pipeline_mode<synchronous>, transform_indices = @transform_6, window_bounds = array<i64: 1, 128>}, {pipeline_mode = #tpu.pipeline_mode<synchronous>, transform_indices = @transform_7, window_bounds = array<i64: 128, 4>}, {pipeline_mode = #tpu.pipeline_mode<synchronous>, transform_indices = @transform_8, window_bounds = array<i64: 1, 4>}, {transform_indices = @transform_9, window_bounds = array<i64: 2, 4>}]} {
    %c0 = arith.constant 0 : index
    %c0_0 = arith.constant 0 : index
    %0 = vector.load %arg1[%c0, %c0_0] : memref<2x16xf32, #tpu.memory_space<vmem>>, vector<2x16xf32>
    %1 = arith.truncf %0 : vector<2x16xf32> to vector<2x16xbf16>
    %c0_1 = arith.constant 0 : index
    %c0_2 = arith.constant 0 : index
    %2 = vector.load %arg2[%c0_1, %c0_2] : memref<16x128xbf16, #tpu.memory_space<vmem>>, vector<16x128xbf16>
    %cst = arith.constant dense<0.000000e+00> : vector<2x128xf32>
    %3 = tpu.matmul %1, %2, %cst {dimension_numbers = #tpu.dot_dimension_numbers<[1], [0], [0], [1], [0, 0, 1, 1], [], []>} : vector<2x16xbf16>, vector<16x128xbf16>, vector<2x128xf32> -> vector<2x128xf32>
    %c0_3 = arith.constant 0 : index
    %c0_4 = arith.constant 0 : index
    %4 = vector.load %arg3[%c0_3, %c0_4] : memref<1x128xf32, #tpu.memory_space<vmem>>, vector<1x128xf32>
    %5 = vector.broadcast %4 : vector<1x128xf32> to vector<2x128xf32>
    %6 = arith.addf %3, %5 : vector<2x128xf32>
    %cst_5 = arith.constant 0.000000e+00 : f32
    %7 = vector.broadcast %cst_5 : f32 to vector<2x128xf32>
    %8 = arith.maximumf %6, %7 : vector<2x128xf32>
    %9 = arith.truncf %8 : vector<2x128xf32> to vector<2x128xbf16>
    %c0_6 = arith.constant 0 : index
    %c0_7 = arith.constant 0 : index
    %10 = vector.load %arg4[%c0_6, %c0_7] : memref<128x128xbf16, #tpu.memory_space<vmem>>, vector<128x128xbf16>
    %cst_8 = arith.constant dense<0.000000e+00> : vector<2x128xf32>
    %11 = tpu.matmul %9, %10, %cst_8 {dimension_numbers = #tpu.dot_dimension_numbers<[1], [0], [0], [1], [0, 0, 1, 1], [], []>} : vector<2x128xbf16>, vector<128x128xbf16>, vector<2x128xf32> -> vector<2x128xf32>
    %c0_9 = arith.constant 0 : index
    %c0_10 = arith.constant 0 : index
    %12 = vector.load %arg5[%c0_9, %c0_10] : memref<1x128xf32, #tpu.memory_space<vmem>>, vector<1x128xf32>
    %13 = vector.broadcast %12 : vector<1x128xf32> to vector<2x128xf32>
    %14 = arith.addf %11, %13 : vector<2x128xf32>
    %cst_11 = arith.constant 0.000000e+00 : f32
    %15 = vector.broadcast %cst_11 : f32 to vector<2x128xf32>
    %16 = arith.maximumf %14, %15 : vector<2x128xf32>
    %17 = arith.truncf %16 : vector<2x128xf32> to vector<2x128xbf16>
    %c0_12 = arith.constant 0 : index
    %c0_13 = arith.constant 0 : index
    %18 = vector.load %arg6[%c0_12, %c0_13] : memref<128x128xbf16, #tpu.memory_space<vmem>>, vector<128x128xbf16>
    %cst_14 = arith.constant dense<0.000000e+00> : vector<2x128xf32>
    %19 = tpu.matmul %17, %18, %cst_14 {dimension_numbers = #tpu.dot_dimension_numbers<[1], [0], [0], [1], [0, 0, 1, 1], [], []>} : vector<2x128xbf16>, vector<128x128xbf16>, vector<2x128xf32> -> vector<2x128xf32>
    %c0_15 = arith.constant 0 : index
    %c0_16 = arith.constant 0 : index
    %20 = vector.load %arg7[%c0_15, %c0_16] : memref<1x128xf32, #tpu.memory_space<vmem>>, vector<1x128xf32>
    %21 = vector.broadcast %20 : vector<1x128xf32> to vector<2x128xf32>
    %22 = arith.addf %19, %21 : vector<2x128xf32>
    %cst_17 = arith.constant 0.000000e+00 : f32
    %23 = vector.broadcast %cst_17 : f32 to vector<2x128xf32>
    %24 = arith.maximumf %22, %23 : vector<2x128xf32>
    %25 = arith.truncf %24 : vector<2x128xf32> to vector<2x128xbf16>
    %c0_18 = arith.constant 0 : index
    %c0_19 = arith.constant 0 : index
    %26 = vector.load %arg8[%c0_18, %c0_19] : memref<128x4xbf16, #tpu.memory_space<vmem>>, vector<128x4xbf16>
    %cst_20 = arith.constant dense<0.000000e+00> : vector<2x4xf32>
    %27 = tpu.matmul %25, %26, %cst_20 {dimension_numbers = #tpu.dot_dimension_numbers<[1], [0], [0], [1], [0, 0, 1, 1], [], []>} : vector<2x128xbf16>, vector<128x4xbf16>, vector<2x4xf32> -> vector<2x4xf32>
    %c0_21 = arith.constant 0 : index
    %c0_22 = arith.constant 0 : index
    %28 = vector.load %arg9[%c0_21, %c0_22] : memref<1x4xf32, #tpu.memory_space<vmem>>, vector<1x4xf32>
    %29 = vector.broadcast %28 : vector<1x4xf32> to vector<2x4xf32>
    %30 = arith.addf %27, %29 : vector<2x4xf32>
    %c0_23 = arith.constant 0 : index
    %c0_24 = arith.constant 0 : index
    %31 = vector.load %arg10[%c0_23, %c0_24] : memref<2x4xf32, #tpu.memory_space<vmem>>, vector<2x4xf32>
    tpu.vector_store %arg10[%c0_23, %c0_24], %30 {strides = array<i32>} : memref<2x4xf32, #tpu.memory_space<vmem>>, vector<2x4xf32>,
    return
  }
  func.func @transform_0(%arg0: i32) -> (i32, i32) {
    %c0_i32 = arith.constant 0 : i32
    %c0_i32_0 = arith.constant 0 : i32
    return %arg0, %c0_i32 : i32, i32
  }
  func.func @transform_1(%arg0: i32) -> (i32, i32) {
    %c0_i32 = arith.constant 0 : i32
    %c0_i32_0 = arith.constant 0 : i32
    %c0_i32_1 = arith.constant 0 : i32
    return %c0_i32, %c0_i32_0 : i32, i32
  }
  func.func @transform_2(%arg0: i32) -> (i32, i32) {
    %c0_i32 = arith.constant 0 : i32
    %c0_i32_0 = arith.constant 0 : i32
    %c0_i32_1 = arith.constant 0 : i32
    return %c0_i32, %c0_i32_0 : i32, i32
  }
  func.func @transform_3(%arg0: i32) -> (i32, i32) {
    %c0_i32 = arith.constant 0 : i32
    %c0_i32_0 = arith.constant 0 : i32
    %c0_i32_1 = arith.constant 0 : i32
    return %c0_i32, %c0_i32_0 : i32, i32
  }
  func.func @transform_4(%arg0: i32) -> (i32, i32) {
    %c0_i32 = arith.constant 0 : i32
    %c0_i32_0 = arith.constant 0 : i32
    %c0_i32_1 = arith.constant 0 : i32
    return %c0_i32, %c0_i32_0 : i32, i32
  }
  func.func @transform_5(%arg0: i32) -> (i32, i32) {
    %c0_i32 = arith.constant 0 : i32
    %c0_i32_0 = arith.constant 0 : i32
    %c0_i32_1 = arith.constant 0 : i32
    return %c0_i32, %c0_i32_0 : i32, i32
  }
  func.func @transform_6(%arg0: i32) -> (i32, i32) {
    %c0_i32 = arith.constant 0 : i32
    %c0_i32_0 = arith.constant 0 : i32
    %c0_i32_1 = arith.constant 0 : i32
    return %c0_i32, %c0_i32_0 : i32, i32
  }
  func.func @transform_7(%arg0: i32) -> (i32, i32) {
    %c0_i32 = arith.constant 0 : i32
    %c0_i32_0 = arith.constant 0 : i32
    %c0_i32_1 = arith.constant 0 : i32
    return %c0_i32, %c0_i32_0 : i32, i32
  }
  func.func @transform_8(%arg0: i32) -> (i32, i32) {
    %c0_i32 = arith.constant 0 : i32
    %c0_i32_0 = arith.constant 0 : i32
    %c0_i32_1 = arith.constant 0 : i32
    return %c0_i32, %c0_i32_0 : i32, i32
  }
  func.func @transform_9(%arg0: i32) -> (i32, i32) {
    %c0_i32 = arith.constant 0 : i32
    %c0_i32_0 = arith.constant 0 : i32
    return %arg0, %c0_i32 : i32, i32
  }
}

</mosaic_0001>

<llo_original>
// kernel: dense_network_forward.1
$region0: #{dense_network_forward.1}
  #allocation0 [shape = 'u32[]', space=smem, size = 0x4, offset = 0x4, fixed_abs, tag = 'smem constant byte address 0x4 - core index']
  #allocation1 [shape = 'u32[144,128]{1,0:T(1,128)}', space=vmem, size = 0x12000, scoped, tag = 'internal scratch']
  %s0 = inlined_call_operand.vmem [shape: f32[2,16], index: 0, kind: input, shape index: {}]
  %s1 = inlined_call_operand.vmem [shape: bf16[16,128], index: 1, kind: input, shape index: {}]
  %s2 = inlined_call_operand.vmem [shape: f32[1,128], index: 2, kind: input, shape index: {}]
  %s3 = inlined_call_operand.vmem [shape: bf16[128,128], index: 3, kind: input, shape index: {}]
  %s4 = inlined_call_operand.vmem [shape: f32[1,128], index: 4, kind: input, shape index: {}]
  %s5 = inlined_call_operand.hbm [shape: bf16[128,128], index: 5, kind: input, shape index: {}]
  %s6 = inlined_call_operand.vmem [shape: f32[1,128], index: 6, kind: input, shape index: {}]
  %s7 = inlined_call_operand.vmem [shape: bf16[128,4], index: 7, kind: input, shape index: {}]
  %s8 = inlined_call_operand.vmem [shape: f32[1,4], index: 8, kind: input, shape index: {}]
  %s9 = inlined_call_operand.hbm [shape: f32[2,4], index: 9, kind: output, shape index: {}]
  %s10 = sld [smem:[#allocation0]]
  $region50: #{dense_network_forward.1} parent=0
    _
  %s12 = ssub.s32 1, %s10
  %s13 = scalar_select 0, %s12, %s10
  $region1: #{dense_network_forward.1} parent=0
    #allocation2 [shape = 'u8[32768]{0}', space=vmem, size = 0x8000, scoped, tag = 'input window, operand 5, single buffered']
    #allocation3 [shape = 's32[1]{0}', space=sflag, size = 0x4, scoped, tag = 'scoped memory for dense_network_forward.1']
    #allocation4 [shape = 's32[1]{0}', space=sflag, size = 0x4, scoped, tag = 'scoped memory for dense_network_forward.1']
    #allocation5 [shape = 'u8[1024]{0}', space=vmem, size = 0x400, scoped, tag = 'output window, operand 0, single buffered']
    %14 = vsyncpa [#allocation3], 0
    %15 = vsyncpa [#allocation4], 0
    // Predicated region
    $region2: #{dense_network_forward.1} parent=1 // pred_check
      _
    $region3: #{dense_network_forward.1} parent=1 // pred_check_branch
      %17 = sbr.rel (0) target = $region5
    $region4: #{dense_network_forward.1} parent=1 // pred_region
      _
    $region5: #{dense_network_forward.1} parent=1 // pred_fallthru
      _
    // Predicated region
    $region6: #{dense_network_forward.1} parent=1 // pred_check
      _
    $region7: #{dense_network_forward.1} parent=1 // pred_check_branch
      %19 = sbr.rel (0) target = $region9
    $region8: #{dense_network_forward.1} parent=1 // pred_region
      _
    $region9: #{dense_network_forward.1} parent=1 // pred_fallthru
      _
    // Predicated region
    $region10: #{dense_network_forward.1} parent=1 // pred_check
      _
    $region11: #{dense_network_forward.1} parent=1 // pred_check_branch
      %21 = sbr.rel (0) target = $region13
    $region12: #{dense_network_forward.1} parent=1 // pred_region
      _
    $region13: #{dense_network_forward.1} parent=1 // pred_fallthru
      _
    // Predicated region
    $region14: #{dense_network_forward.1} parent=1 // pred_check
      _
    $region15: #{dense_network_forward.1} parent=1 // pred_check_branch
      %23 = sbr.rel (0) target = $region17
    $region16: #{dense_network_forward.1} parent=1 // pred_region
      _
    $region17: #{dense_network_forward.1} parent=1 // pred_fallthru
      _
    // Predicated region
    $region18: #{dense_network_forward.1} parent=1 // pred_check
      _
    $region19: #{dense_network_forward.1} parent=1 // pred_check_branch
      %25 = sbr.rel (0) target = $region21
    $region20: #{dense_network_forward.1} parent=1 // pred_region
      _
    $region21: #{dense_network_forward.1} parent=1 // pred_fallthru
      _
    // Predicated region
    $region22: #{dense_network_forward.1} parent=1 // pred_check
      _
    $region23: #{dense_network_forward.1} parent=1 // pred_check_branch
      %27 = sbr.rel (0) target = $region25
    $region24: #{dense_network_forward.1} parent=1 // pred_region
      %s29 = ssub.s32 1024, 1024
      %30 = vsyncadd [#allocation3], %s29
      %s31 = sshll.u32 [#allocation2], 4
      %s32 = int_to_ptr.vmem [resolvable:$true] %s31
      %37 = dma.hbm_to_vmem [thread:$0]  %s5, 1024, %s32, [#allocation3], 64, 64, 4
    $region25: #{dense_network_forward.1} parent=1 // pred_fallthru
      _
    // Predicated region
    $region26: #{dense_network_forward.1} parent=1 // pred_check
      _
    $region27: #{dense_network_forward.1} parent=1 // pred_check_branch
      %39 = sbr.rel (0) target = $region29
    $region28: #{dense_network_forward.1} parent=1 // pred_region
      _
    $region29: #{dense_network_forward.1} parent=1 // pred_fallthru
      _
    // Predicated region
    $region30: #{dense_network_forward.1} parent=1 // pred_check
      _
    $region31: #{dense_network_forward.1} parent=1 // pred_check_branch
      %41 = sbr.rel (0) target = $region33
    $region32: #{dense_network_forward.1} parent=1 // pred_region
      _
    $region33: #{dense_network_forward.1} parent=1 // pred_fallthru
      _
    // Predicated region
    $region34: #{dense_network_forward.1} parent=1 // pred_check
      _
    $region35: #{dense_network_forward.1} parent=1 // pred_check_branch
      %43 = sbr.rel (0) target = $region37
    $region36: #{dense_network_forward.1} parent=1 // pred_region
      _
    $region37: #{dense_network_forward.1} parent=1 // pred_fallthru
      _
    // Predicated region
    $region38: #{dense_network_forward.1} parent=1 // pred_check
      _
    $region39: #{dense_network_forward.1} parent=1 // pred_check_branch
      %45 = sbr.rel (0) target = $region41
    $region40: #{dense_network_forward.1} parent=1 // pred_region
      %46 = dma.done [#allocation3], 1024
    $region41: #{dense_network_forward.1} parent=1 // pred_fallthru
      _
    %v48 = vld [vmem:[%s0] sm:$0x3]
    %v49 = vpack.c.bf16 %v48, %v48
    %v50 = vld [vmem:[%s1] sm:$0xf]
    %v51 = vld [vmem:[%s1 + $0x4] sm:$0xf]
    %v52 = vld [vmem:[%s2] sm:$0x1]
    %v54 = vlaneseq
    %v55 = vshrl.u32 %v54, 7
    %v56 = vsub.s32 0, %v55
    %v57 = vrot.slane %v52, %v56
    %v61 = vunpack.c.l.b16 %v50
    %v62 = vunpack.c.l.b16 %v51
    %v63 = vpack.c.b16 %v62, %v61
    %vm65 = vcmask 130048
    %v67 = vsel %vm65, %v49, 0
    %69 = vmatprep.subr.bf16.mxu0 0
    %70 = vmatpush1.bf16.msra.mxu0 %v63
    %71 = vmatprep.subr.bf16.mxu0 0
    %72 = vmatpush1.bf16.msra.mxu0 0
    %73 = vmatprep.subr.bf16.mxu0 0
    %74 = vmatpush1.bf16.msra.mxu0 0
    %75 = vmatprep.subr.bf16.mxu0 0
    %76 = vmatpush1.bf16.msra.mxu0 0
    %77 = vmatprep.subr.bf16.mxu0 0
    %78 = vmatpush1.bf16.msra.mxu0 0
    %79 = vmatprep.subr.bf16.mxu0 0
    %80 = vmatpush1.bf16.msra.mxu0 0
    %81 = vmatprep.subr.bf16.mxu0 0
    %82 = vmatpush1.bf16.msra.mxu0 0
    %83 = vmatprep.subr.bf16.mxu0 0
    %84 = vmatpush1.bf16.msra.mxu0 0
    %85 = vmatprep.subr.bf16.mxu0 0
    %86 = vmatpush1.bf16.msra.mxu0 0
    %87 = vmatprep.subr.bf16.mxu0 0
    %88 = vmatpush1.bf16.msra.mxu0 0
    %89 = vmatprep.subr.bf16.mxu0 0
    %90 = vmatpush1.bf16.msra.mxu0 0
    %91 = vmatprep.subr.bf16.mxu0 0
    %92 = vmatpush1.bf16.msra.mxu0 0
    %93 = vmatprep.subr.bf16.mxu0 0
    %94 = vmatpush1.bf16.msra.mxu0 0
    %95 = vmatprep.subr.bf16.mxu0 0
    %96 = vmatpush1.bf16.msra.mxu0 0
    %97 = vmatprep.subr.bf16.mxu0 0
    %98 = vmatpush1.bf16.msra.mxu0 0
    %99 = vmatprep.subr.bf16.mxu0 0
    %100 = vmatpush1.bf16.msra.mxu0 0
    %101 = vmatprep.mubr.bf16.mxu0 0
    %102 = vmatmul.mubr.bf16.gmra.mrb[0].mxu0 %v67
    %v103 = vpop.f32.mrb[0].mxu0
    %v104 = vadd.f32 %v57, %v103
    %v105 = vpop.f32.mrb[0].mxu0
    %v106 = vpop.f32.mrb[0].mxu0
    %v107 = vpop.f32.mrb[0].mxu0
    %108 = vdwg.mxu0
    %v109 = vmax.f32 %v104, 0.0
    %v110 = vpack.c.bf16 %v109, %v109
    %v111 = vld [vmem:[%s3] sm:$0xf]
    %v112 = vld [vmem:[%s3 + $0x4] sm:$0xf]
    %v113 = vld [vmem:[%s3 + $0x8] sm:$0xf]
    %v114 = vld [vmem:[%s3 + $0xc] sm:$0xf]
    %v115 = vld [vmem:[%s3 + $0x10] sm:$0xf]
    %v116 = vld [vmem:[%s3 + $0x14] sm:$0xf]
    %v117 = vld [vmem:[%s3 + $0x18] sm:$0xf]
    %v118 = vld [vmem:[%s3 + $0x1c] sm:$0xf]
    %v119 = vld [vmem:[%s3 + $0x20] sm:$0xf]
    %v120 = vld [vmem:[%s3 + $0x24] sm:$0xf]
    %v121 = vld [vmem:[%s3 + $0x28] sm:$0xf]
    %v122 = vld [vmem:[%s3 + $0x2c] sm:$0xf]
    %v123 = vld [vmem:[%s3 + $0x30] sm:$0xf]
    %v124 = vld [vmem:[%s3 + $0x34] sm:$0xf]
    %v125 = vld [vmem:[%s3 + $0x38] sm:$0xf]
    %v126 = vld [vmem:[%s3 + $0x3c] sm:$0xf]
    %v127 = vld [vmem:[%s4] sm:$0x1]
    %v129 = vlaneseq
    %v130 = vshrl.u32 %v129, 7
    %v131 = vsub.s32 0, %v130
    %v132 = vrot.slane %v127, %v131
    %v150 = vunpack.c.l.b16 %v111
    %v151 = vunpack.c.l.b16 %v112
    %v152 = vunpack.c.l.b16 %v113
    %v153 = vunpack.c.l.b16 %v114
    %v154 = vunpack.c.l.b16 %v115
    %v155 = vunpack.c.l.b16 %v116
    %v156 = vunpack.c.l.b16 %v117
    %v157 = vunpack.c.l.b16 %v118
    %v158 = vunpack.c.l.b16 %v119
    %v159 = vunpack.c.l.b16 %v120
    %v160 = vunpack.c.l.b16 %v121
    %v161 = vunpack.c.l.b16 %v122
    %v162 = vunpack.c.l.b16 %v123
    %v163 = vunpack.c.l.b16 %v124
    %v164 = vunpack.c.l.b16 %v125
    %v165 = vunpack.c.l.b16 %v126
    %v166 = vpack.c.b16 %v151, %v150
    %v167 = vpack.c.b16 %v153, %v152
    %v168 = vpack.c.b16 %v155, %v154
    %v169 = vpack.c.b16 %v157, %v156
    %v170 = vpack.c.b16 %v159, %v158
    %v171 = vpack.c.b16 %v161, %v160
    %v172 = vpack.c.b16 %v163, %v162
    %v173 = vpack.c.b16 %v165, %v164
    %182 = vmatprep.subr.bf16.mxu0 0
    %183 = vmatpush1.bf16.msra.mxu0 %v166
    %184 = vmatprep.subr.bf16.mxu0 0
    %185 = vmatpush1.bf16.msra.mxu0 %v167
    %186 = vmatprep.subr.bf16.mxu0 0
    %187 = vmatpush1.bf16.msra.mxu0 %v168
    %188 = vmatprep.subr.bf16.mxu0 0
    %189 = vmatpush1.bf16.msra.mxu0 %v169
    %190 = vmatprep.subr.bf16.mxu0 0
    %191 = vmatpush1.bf16.msra.mxu0 %v170
    %192 = vmatprep.subr.bf16.mxu0 0
    %193 = vmatpush1.bf16.msra.mxu0 %v171
    %194 = vmatprep.subr.bf16.mxu0 0
    %195 = vmatpush1.bf16.msra.mxu0 %v172
    %196 = vmatprep.subr.bf16.mxu0 0
    %197 = vmatpush1.bf16.msra.mxu0 %v173
    %198 = vmatprep.subr.bf16.mxu0 0
    %199 = vmatpush1.bf16.msra.mxu0 0
    %200 = vmatprep.subr.bf16.mxu0 0
    %201 = vmatpush1.bf16.msra.mxu0 0
    %202 = vmatprep.subr.bf16.mxu0 0
    %203 = vmatpush1.bf16.msra.mxu0 0
    %204 = vmatprep.subr.bf16.mxu0 0
    %205 = vmatpush1.bf16.msra.mxu0 0
    %206 = vmatprep.subr.bf16.mxu0 0
    %207 = vmatpush1.bf16.msra.mxu0 0
    %208 = vmatprep.subr.bf16.mxu0 0
    %209 = vmatpush1.bf16.msra.mxu0 0
    %210 = vmatprep.subr.bf16.mxu0 0
    %211 = vmatpush1.bf16.msra.mxu0 0
    %212 = vmatprep.subr.bf16.mxu0 0
    %213 = vmatpush1.bf16.msra.mxu0 0
    %214 = vmatprep.mubr.bf16.mxu0 0
    %215 = vmatmul.mubr.bf16.gmra.mrb[0].mxu0 %v110
    %v216 = vpop.f32.mrb[0].mxu0
    %v217 = vadd.f32 %v132, %v216
    %v218 = vpop.f32.mrb[0].mxu0
    %v219 = vpop.f32.mrb[0].mxu0
    %v220 = vpop.f32.mrb[0].mxu0
    %221 = vdwg.mxu0
    %v222 = vmax.f32 %v217, 0.0
    %v223 = vpack.c.bf16 %v222, %v222
    %v224 = vld [vmem:[#allocation2] sm:$0xf]
    %v225 = vld [vmem:[#allocation2 + $0x4] sm:$0xf]
    %v226 = vld [vmem:[#allocation2 + $0x8] sm:$0xf]
    %v227 = vld [vmem:[#allocation2 + $0xc] sm:$0xf]
    %v228 = vld [vmem:[#allocation2 + $0x10] sm:$0xf]
    %v229 = vld [vmem:[#allocation2 + $0x14] sm:$0xf]
    %v230 = vld [vmem:[#allocation2 + $0x18] sm:$0xf]
    %v231 = vld [vmem:[#allocation2 + $0x1c] sm:$0xf]
    %v232 = vld [vmem:[#allocation2 + $0x20] sm:$0xf]
    %v233 = vld [vmem:[#allocation2 + $0x24] sm:$0xf]
    %v234 = vld [vmem:[#allocation2 + $0x28] sm:$0xf]
    %v235 = vld [vmem:[#allocation2 + $0x2c] sm:$0xf]
    %v236 = vld [vmem:[#allocation2 + $0x30] sm:$0xf]
    %v237 = vld [vmem:[#allocation2 + $0x34] sm:$0xf]
    %v238 = vld [vmem:[#allocation2 + $0x38] sm:$0xf]
    %v239 = vld [vmem:[#allocation2 + $0x3c] sm:$0xf]
    %v240 = vld [vmem:[%s6] sm:$0x1]
    %v242 = vlaneseq
    %v243 = vshrl.u32 %v242, 7
    %v244 = vsub.s32 0, %v243
    %v245 = vrot.slane %v240, %v244
    %v263 = vunpack.c.l.b16 %v224
    %v264 = vunpack.c.l.b16 %v225
    %v265 = vunpack.c.l.b16 %v226
    %v266 = vunpack.c.l.b16 %v227
    %v267 = vunpack.c.l.b16 %v228
    %v268 = vunpack.c.l.b16 %v229
    %v269 = vunpack.c.l.b16 %v230
    %v270 = vunpack.c.l.b16 %v231
    %v271 = vunpack.c.l.b16 %v232
    %v272 = vunpack.c.l.b16 %v233
    %v273 = vunpack.c.l.b16 %v234
    %v274 = vunpack.c.l.b16 %v235
    %v275 = vunpack.c.l.b16 %v236
    %v276 = vunpack.c.l.b16 %v237
    %v277 = vunpack.c.l.b16 %v238
    %v278 = vunpack.c.l.b16 %v239
    %v279 = vpack.c.b16 %v264, %v263
    %v280 = vpack.c.b16 %v266, %v265
    %v281 = vpack.c.b16 %v268, %v267
    %v282 = vpack.c.b16 %v270, %v269
    %v283 = vpack.c.b16 %v272, %v271
    %v284 = vpack.c.b16 %v274, %v273
    %v285 = vpack.c.b16 %v276, %v275
    %v286 = vpack.c.b16 %v278, %v277
    %295 = vmatprep.subr.bf16.mxu0 0
    %296 = vmatpush1.bf16.msra.mxu0 %v279
    %297 = vmatprep.subr.bf16.mxu0 0
    %298 = vmatpush1.bf16.msra.mxu0 %v280
    %299 = vmatprep.subr.bf16.mxu0 0
    %300 = vmatpush1.bf16.msra.mxu0 %v281
    %301 = vmatprep.subr.bf16.mxu0 0
    %302 = vmatpush1.bf16.msra.mxu0 %v282
    %303 = vmatprep.subr.bf16.mxu0 0
    %304 = vmatpush1.bf16.msra.mxu0 %v283
    %305 = vmatprep.subr.bf16.mxu0 0
    %306 = vmatpush1.bf16.msra.mxu0 %v284
    %307 = vmatprep.subr.bf16.mxu0 0
    %308 = vmatpush1.bf16.msra.mxu0 %v285
    %309 = vmatprep.subr.bf16.mxu0 0
    %310 = vmatpush1.bf16.msra.mxu0 %v286
    %311 = vmatprep.subr.bf16.mxu0 0
    %312 = vmatpush1.bf16.msra.mxu0 0
    %313 = vmatprep.subr.bf16.mxu0 0
    %314 = vmatpush1.bf16.msra.mxu0 0
    %315 = vmatprep.subr.bf16.mxu0 0
    %316 = vmatpush1.bf16.msra.mxu0 0
    %317 = vmatprep.subr.bf16.mxu0 0
    %318 = vmatpush1.bf16.msra.mxu0 0
    %319 = vmatprep.subr.bf16.mxu0 0
    %320 = vmatpush1.bf16.msra.mxu0 0
    %321 = vmatprep.subr.bf16.mxu0 0
    %322 = vmatpush1.bf16.msra.mxu0 0
    %323 = vmatprep.subr.bf16.mxu0 0
    %324 = vmatpush1.bf16.msra.mxu0 0
    %325 = vmatprep.subr.bf16.mxu0 0
    %326 = vmatpush1.bf16.msra.mxu0 0
    %327 = vmatprep.mubr.bf16.mxu0 0
    %328 = vmatmul.mubr.bf16.gmra.mrb[0].mxu0 %v223
    %v329 = vpop.f32.mrb[0].mxu0
    %v330 = vadd.f32 %v245, %v329
    %v331 = vpop.f32.mrb[0].mxu0
    %v332 = vpop.f32.mrb[0].mxu0
    %v333 = vpop.f32.mrb[0].mxu0
    %334 = vdwg.mxu0
    %v335 = vmax.f32 %v330, 0.0
    %v336 = vpack.c.bf16 %v335, %v335
    %v337 = vld [vmem:[%s7] sm:$0xf]
    %v338 = vld [vmem:[%s7 + $0x4] sm:$0xf]
    %v339 = vld [vmem:[%s7 + $0x8] sm:$0xf]
    %v340 = vld [vmem:[%s7 + $0xc] sm:$0xf]
    %v341 = vld [vmem:[%s7 + $0x10] sm:$0xf]
    %v342 = vld [vmem:[%s7 + $0x14] sm:$0xf]
    %v343 = vld [vmem:[%s7 + $0x18] sm:$0xf]
    %v344 = vld [vmem:[%s7 + $0x1c] sm:$0xf]
    %v345 = vld [vmem:[%s7 + $0x20] sm:$0xf]
    %v346 = vld [vmem:[%s7 + $0x24] sm:$0xf]
    %v347 = vld [vmem:[%s7 + $0x28] sm:$0xf]
    %v348 = vld [vmem:[%s7 + $0x2c] sm:$0xf]
    %v349 = vld [vmem:[%s7 + $0x30] sm:$0xf]
    %v350 = vld [vmem:[%s7 + $0x34] sm:$0xf]
    %v351 = vld [vmem:[%s7 + $0x38] sm:$0xf]
    %v352 = vld [vmem:[%s7 + $0x3c] sm:$0xf]
    %v353 = vld [vmem:[%s8] sm:$0x1]
    %v355 = vlaneseq
    %v356 = vshrl.u32 %v355, 7
    %v357 = vsub.s32 0, %v356
    %v358 = vrot.slane %v353, %v357
    %v376 = vunpack.c.l.b16 %v337
    %v377 = vunpack.c.l.b16 %v338
    %v378 = vunpack.c.l.b16 %v339
    %v379 = vunpack.c.l.b16 %v340
    %v380 = vunpack.c.l.b16 %v341
    %v381 = vunpack.c.l.b16 %v342
    %v382 = vunpack.c.l.b16 %v343
    %v383 = vunpack.c.l.b16 %v344
    %v384 = vunpack.c.l.b16 %v345
    %v385 = vunpack.c.l.b16 %v346
    %v386 = vunpack.c.l.b16 %v347
    %v387 = vunpack.c.l.b16 %v348
    %v388 = vunpack.c.l.b16 %v349
    %v389 = vunpack.c.l.b16 %v350
    %v390 = vunpack.c.l.b16 %v351
    %v391 = vunpack.c.l.b16 %v352
    %v392 = vpack.c.b16 %v377, %v376
    %v393 = vpack.c.b16 %v379, %v378
    %v394 = vpack.c.b16 %v381, %v380
    %v395 = vpack.c.b16 %v383, %v382
    %v396 = vpack.c.b16 %v385, %v384
    %v397 = vpack.c.b16 %v387, %v386
    %v398 = vpack.c.b16 %v389, %v388
    %v399 = vpack.c.b16 %v391, %v390
    %408 = vmatprep.subr.bf16.mxu0 0
    %409 = vmatpush1.bf16.msra.mxu0 %v392
    %410 = vmatprep.subr.bf16.mxu0 0
    %411 = vmatpush1.bf16.msra.mxu0 %v393
    %412 = vmatprep.subr.bf16.mxu0 0
    %413 = vmatpush1.bf16.msra.mxu0 %v394
    %414 = vmatprep.subr.bf16.mxu0 0
    %415 = vmatpush1.bf16.msra.mxu0 %v395
    %416 = vmatprep.subr.bf16.mxu0 0
    %417 = vmatpush1.bf16.msra.mxu0 %v396
    %418 = vmatprep.subr.bf16.mxu0 0
    %419 = vmatpush1.bf16.msra.mxu0 %v397
    %420 = vmatprep.subr.bf16.mxu0 0
    %421 = vmatpush1.bf16.msra.mxu0 %v398
    %422 = vmatprep.subr.bf16.mxu0 0
    %423 = vmatpush1.bf16.msra.mxu0 %v399
    %424 = vmatprep.subr.bf16.mxu0 0
    %425 = vmatpush1.bf16.msra.mxu0 0
    %426 = vmatprep.subr.bf16.mxu0 0
    %427 = vmatpush1.bf16.msra.mxu0 0
    %428 = vmatprep.subr.bf16.mxu0 0
    %429 = vmatpush1.bf16.msra.mxu0 0
    %430 = vmatprep.subr.bf16.mxu0 0
    %431 = vmatpush1.bf16.msra.mxu0 0
    %432 = vmatprep.subr.bf16.mxu0 0
    %433 = vmatpush1.bf16.msra.mxu0 0
    %434 = vmatprep.subr.bf16.mxu0 0
    %435 = vmatpush1.bf16.msra.mxu0 0
    %436 = vmatprep.subr.bf16.mxu0 0
    %437 = vmatpush1.bf16.msra.mxu0 0
    %438 = vmatprep.subr.bf16.mxu0 0
    %439 = vmatpush1.bf16.msra.mxu0 0
    %440 = vmatprep.mubr.bf16.mxu0 0
    %441 = vmatmul.mubr.bf16.gmra.mrb[0].mxu0 %v336
    %v442 = vpop.f32.mrb[0].mxu0
    %v443 = vadd.f32 %v358, %v442
    %v444 = vpop.f32.mrb[0].mxu0
    %v445 = vpop.f32.mrb[0].mxu0
    %v446 = vpop.f32.mrb[0].mxu0
    %447 = vdwg.mxu0
    %vm448 = vcmask 25600
    %449 = vst.msk [vmem:[#allocation5] sm:$0x3] %vm448, %v443
    // Predicated region
    $region42: #{dense_network_forward.1} parent=1 // pred_check
      _
    $region43: #{dense_network_forward.1} parent=1 // pred_check_branch
      %451 = sbr.rel (0) target = $region45
    $region44: #{dense_network_forward.1} parent=1 // pred_region
      %s453 = ssub.s32 32, 32
      %454 = vsyncadd [#allocation4], %s453
      %s456 = sshll.u32 [#allocation5], 4
      %s457 = int_to_ptr.vmem [resolvable:$true] %s456
      %459 = dma.vmem_to_hbm [thread:$0]  %s457, 32, %s9, [#allocation4]
    $region45: #{dense_network_forward.1} parent=1 // pred_fallthru
      _
    // Predicated region
    $region46: #{dense_network_forward.1} parent=1 // pred_check
      _
    $region47: #{dense_network_forward.1} parent=1 // pred_check_branch
      %461 = sbr.rel (0) target = $region49
    $region48: #{dense_network_forward.1} parent=1 // pred_region
      %462 = dma.done [#allocation4], 32
    $region49: #{dense_network_forward.1} parent=1 // pred_fallthru
      _
    %463 = vsyncpa [#allocation3], 1
    %464 = vsyncpa [#allocation4], 1

</llo_original>
